<compile_context>
chip_gen: v6e
topology: v6e:2x2x1
jax: 0.10.0
libtpu: 0.0.40
codegen_flags: <defaults>
</compile_context>

<pallas_src>
import math

import numpy as np

import jax
import jax.numpy as jnp
from jax.experimental import pallas as pl
from jax.experimental.pallas import tpu as pltpu

_LANE = 128
_VMEM_TILE_BUDGET = 8 * 1024 * 1024    # double-buffered in+out tile bytes per grid step
_VMEM_TILE_CEILING = 24 * 1024 * 1024  # hard ceiling after sublane-alignment rounding


def _output_size(h_in, w_in, size, scale_factor):
    if size is not None:
        if isinstance(size, (tuple, list)):
            return int(size[0]), int(size[1])
        return int(size), int(size)
    if scale_factor is None:
        raise ValueError("either size or scale_factor must be given")
    if isinstance(scale_factor, (tuple, list)):
        sf_h, sf_w = scale_factor
    else:
        sf_h = sf_w = scale_factor
    return int(math.floor(h_in * sf_h)), int(math.floor(w_in * sf_w))


def _pad_lane(n):
    return ((n + _LANE - 1) // _LANE) * _LANE


def _choose_c_tile(nc, per_c_bytes, cap=None):
    """Largest channel-tile that keeps double-buffered tiles well under VMEM."""
    c_tile = max(1, _VMEM_TILE_BUDGET // max(per_c_bytes, 1))
    if cap is not None:
        c_tile = min(c_tile, cap)
    if nc > 1:
        c_tile = min(c_tile, (nc + 1) // 2)  # keep >= 2 grid steps so both v7x TCs get work
    return int(max(1, min(c_tile, nc)))


def _make_fast_copy_kernel(w_in, in_w):
    """Integer H-stride, identity W: pure slice-copy (no MXU work at all)."""
    needs_slice = in_w != w_in

    def kernel(x_ref, o_ref):
        xs = x_ref[:, :w_in] if needs_slice else x_ref[...]
        o_ref[...] = xs.astype(o_ref.dtype)

    return kernel


def _make_fast_matmul_kernel(w_in, in_w, cdt):
    """Integer H-stride path: rows pre-selected by reshape/DMA, W via one matmul."""
    needs_slice = in_w != w_in

    def kernel(x_ref, sw_ref, o_ref):
        # x_ref: (c_tile*h_out, in_w); first w_in lanes of each row are the
        # selected source row.  sw_ref: (w_in, w_out) 0/1 column selector.
        xs = x_ref[:, :w_in] if needs_slice else x_ref[...]
        y = jnp.dot(xs.astype(cdt), sw_ref[...], preferred_element_type=jnp.float32)
        o_ref[...] = y.astype(o_ref.dtype)

    return kernel


def _make_general_kernel(c_tile, cdt):
    """General ratio (incl. upsampling): row + column selection matmuls per slab."""

    def kernel(x_ref, sht_ref, sw_ref, o_ref):
        # x_ref: (c_tile, h_in, w_in); sht_ref: (h_out, h_in); sw_ref: (w_in, w_out)
        sht = sht_ref[...]
        sw = sw_ref[...]
        for cc in range(c_tile):  # static unroll; c_tile capped small on this path
            t = jnp.dot(sht, x_ref[cc].astype(cdt), preferred_element_type=jnp.float32)
            y = jnp.dot(t.astype(cdt), sw, preferred_element_type=jnp.float32)
            o_ref[cc] = y.astype(o_ref.dtype)

    return kernel


def downsample_nearest(x, size=None, scale_factor=None):
    """Equivalent of F.interpolate(x, size, scale_factor, mode='nearest') for NCHW x."""
    n, c, h_in, w_in = x.shape
    h_out, w_out = _output_size(h_in, w_in, size, scale_factor)
    if h_out <= 0 or w_out <= 0:
        raise ValueError(f"invalid output size ({h_out}, {w_out})")
    if (h_out, w_out) == (h_in, w_in):
        return x  # identity resample

    nc = n * c

    # Exact integer source indices (PyTorch legacy 'nearest': floor(dst*in/out)).
    src_h = ((np.arange(h_out) * h_in) // h_out).astype(np.int32)
    src_w = ((np.arange(w_out) * w_in) // w_out).astype(np.int32)

    # 0/1 selection matrices are exact in any dtype -> match x (keeps bf16 on
    # the fast MXU path); other dtypes compute in f32.
    cdt = x.dtype if (x.dtype == jnp.bfloat16 or x.dtype == jnp.float32) else jnp.float32
    itemsize = x.dtype.itemsize

    x_flat = x.reshape(nc, h_in, w_in)
    compiler_params = pltpu.CompilerParams(
        dimension_semantics=("parallel",),    # shard channel tiles across v7x's 2 TensorCores
        vmem_limit_bytes=32 * 1024 * 1024,    # tiles sized to fit all generations (v7x: 64 MiB)
    )

    fast = (h_in % h_out) == 0
    if fast:
        stride_h = h_in // h_out
        row_w = stride_h * w_in
        # DMA only a lane-aligned prefix of each (reshaped) row when it fits:
        # cuts HBM reads by ~stride_h even for non-128-aligned widths.
        in_w = min(_pad_lane(w_in), row_w)
        per_c = 2 * h_out * (_pad_lane(in_w) + _pad_lane(w_out)) * itemsize
        c_tile = _choose_c_tile(nc, per_c)
        # Keep the tile's sublane extent (c_tile*h_out) a multiple of 8.
        m = 8 // math.gcd(h_out, 8)
        if m > 1:
            c_aligned = max(m, (c_tile // m) * m)
            if c_aligned * per_c <= _VMEM_TILE_CEILING:
                c_tile = c_aligned
            else:
                fast = False  # rare: odd h_out with huge rows; general path has full-dim blocks

    if fast:
        nc_pad = -(-nc // c_tile) * c_tile
        if nc_pad != nc:
            x_flat = jnp.pad(x_flat, ((0, nc_pad - nc), (0, 0), (0, 0)))
        grid = (nc_pad // c_tile,)

        # Metadata-only reshape: row r = (channel, out_row); its first w_in
        # lanes are exactly the selected source row (src_h[k] == k*stride_h).
        x_in = x_flat.reshape(nc_pad * h_out, row_w)

        in_specs = [pl.BlockSpec((c_tile * h_out, in_w), lambda i: (i, 0))]
        operands = [x_in]
        if w_out == w_in:
            kernel = _make_fast_copy_kernel(w_in, in_w)       # W untouched -> pure copy
        else:
            sw = jnp.asarray(np.arange(w_in)[:, None] == src_w[None, :], dtype=cdt)
            in_specs.append(pl.BlockSpec((w_in, w_out), lambda i: (0, 0)))
            operands.append(sw)
            kernel = _make_fast_matmul_kernel(w_in, in_w, cdt)

        out2d = pl.pallas_call(
            kernel,
            out_shape=jax.ShapeDtypeStruct((nc_pad * h_out, w_out), x.dtype),
            grid_spec=pltpu.PrefetchScalarGridSpec(
                num_scalar_prefetch=0,
                grid=grid,
                in_specs=in_specs,
                # TODO(synk): for w_out < 128 this store is lane-masked; output volume is
                # 1/(stride_h*stride_w) of the read traffic, so the penalty is minor.
                out_specs=pl.BlockSpec((c_tile * h_out, w_out), lambda i: (i, 0)),
            ),
            compiler_params=compiler_params,
        )(*operands)
        out = out2d.reshape(nc_pad, h_out, w_out)[:nc]
    else:
        # General ratio (incl. upsampling): row-select + column-select matmuls.
        sht = jnp.asarray(src_h[:, None] == np.arange(h_in)[None, :], dtype=cdt)  # (h_out, h_in)
        sw = jnp.asarray(np.arange(w_in)[:, None] == src_w[None, :], dtype=cdt)   # (w_in, w_out)
        per_c = 2 * (h_in * _pad_lane(w_in) + h_out * _pad_lane(w_out)) * itemsize
        c_tile = _choose_c_tile(nc, per_c, cap=8)  # per-channel matmul loop is unrolled
        nc_pad = -(-nc // c_tile) * c_tile
        if nc_pad != nc:
            x_flat = jnp.pad(x_flat, ((0, nc_pad - nc), (0, 0), (0, 0)))
        grid = (nc_pad // c_tile,)

        kernel = _make_general_kernel(c_tile, cdt)
        out3d = pl.pallas_call(
            kernel,
            out_shape=jax.ShapeDtypeStruct((nc_pad, h_out, w_out), x.dtype),
            grid_spec=pltpu.PrefetchScalarGridSpec(
                num_scalar_prefetch=0,
                grid=grid,
                in_specs=[
                    pl.BlockSpec((c_tile, h_in, w_in), lambda i: (i, 0, 0)),
                    pl.BlockSpec((h_out, h_in), lambda i: (0, 0)),
                    pl.BlockSpec((w_in, w_out), lambda i: (0, 0)),
                ],
                out_specs=pl.BlockSpec((c_tile, h_out, w_out), lambda i: (i, 0, 0)),
            ),
            compiler_params=compiler_params,
        )(x_flat, sht, sw)
        out = out3d[:nc]

    return out.reshape(n, c, h_out, w_out)


class Downsample:
    """Pallas-backed equivalent of the PyTorch Downsample module (nearest mode)."""

    def __init__(self, size=None, scale_factor=None, mode="nearest", align_corners=None):
        self.name = type(self).__name__
        self.size = size
        self.scale_factor = scale_factor
        self.mode = mode
        self.align_corners = align_corners
        if mode != "nearest":
            raise NotImplementedError("only mode='nearest' is implemented")

    def __call__(self, x):
        return downsample_nearest(x, size=self.size, scale_factor=self.scale_factor)


if __name__ == "__main__":
    key = jax.random.PRNGKey(0)
    x = jax.random.normal(key, (2, 4, 16, 16), dtype=jnp.float32)

    # 1) Integer-stride fast path (scale 0.5 -> stride-2 nearest), f32.
    y = jax.block_until_ready(Downsample(scale_factor=0.5, mode="nearest")(x))
    assert y.shape == (2, 4, 8, 8), y.shape
    assert jnp.array_equal(y, x[:, :, ::2, ::2]), "fast-path mismatch vs reference"

    # 2) Integer-stride fast path, bf16 (selection matmul exact in bf16).
    xb = x.astype(jnp.bfloat16)
    yb = jax.block_until_ready(Downsample(scale_factor=0.5, mode="nearest")(xb))
    assert yb.dtype == jnp.bfloat16 and yb.shape == (2, 4, 8, 8)
    assert jnp.array_equal(yb, xb[:, :, ::2, ::2]), "bf16 fast-path mismatch vs reference"

    # 3) H-only downsample -> fast path with identity-W copy kernel.
    yh = jax.block_until_ready(Downsample(scale_factor=(0.5, 1.0), mode="nearest")(x))
    assert yh.shape == (2, 4, 8, 16), yh.shape
    assert jnp.array_equal(yh, x[:, :, ::2, :]), "identity-W fast-path mismatch"

    # 4) General-ratio fallback path (explicit target size, non-integer stride).
    y2 = jax.block_until_ready(Downsample(size=(5, 6), mode="nearest")(x))
    sh_idx = jnp.array([(k * 16) // 5 for k in range(5)])
    sw_idx = jnp.array([(k * 16) // 6 for k in range(6)])
    ref2 = x[:, :, sh_idx, :][:, :, :, sw_idx]
    assert y2.shape == (2, 4, 5, 6), y2.shape
    assert jnp.array_equal(y2, ref2), "general-path mismatch vs reference"

    # 5) General path, upsampling (h_out > h_in).
    y3 = jax.block_until_ready(Downsample(size=(20, 20), mode="nearest")(x))
    su_idx = jnp.array([(k * 16) // 20 for k in range(20)])
    ref3 = x[:, :, su_idx, :][:, :, :, su_idx]
    assert y3.shape == (2, 4, 20, 20), y3.shape
    assert jnp.array_equal(y3, ref3), "upsample-path mismatch vs reference"

    # 6) Unaligned width with trimmed-DMA fast path (in_w = 256 of a 400-wide row)
    #    plus sublane-alignment rounding (h_out = 2 -> c_tile multiple of 4).
    x5 = jax.random.normal(jax.random.PRNGKey(0), (1, 2, 4, 200), dtype=jnp.float32)
    y5 = jax.block_until_ready(Downsample(scale_factor=0.5, mode="nearest")(x5))
    assert y5.shape == (1, 2, 2, 100), y5.shape
    assert jnp.array_equal(y5, x5[:, :, ::2, ::2]), "trimmed-DMA fast-path mismatch"

    print("KERNEL_OK")
</pallas_src>

<mosaic_0001>
module attributes {stable_mosaic.version = 11 : i64} {
  func.func @kernel(%arg0: i32, %arg1: memref<32x32xf32, #tpu.memory_space<vmem>>, %arg2: memref<16x8xf32, #tpu.memory_space<vmem>>, %arg3: memref<32x8xf32, #tpu.memory_space<vmem>>) attributes {dimension_semantics = [#tpu.dimension_semantics<parallel>], iteration_bounds = array<i64: 2>, scalar_prefetch = 0 : i64, scratch_operands = 0 : i64, tpu.core_type = #tpu.core_type<tc>, window_params = [{transform_indices = @transform_0, window_bounds = array<i64: 32, 32>}, {pipeline_mode = #tpu.pipeline_mode<synchronous>, transform_indices = @transform_1, window_bounds = array<i64: 16, 8>}, {transform_indices = @transform_2, window_bounds = array<i64: 32, 8>}]} {
    %c0 = arith.constant 0 : index
    %c0_0 = arith.constant 0 : index
    %0 = vector.load %arg1[%c0, %c0_0] : memref<32x32xf32, #tpu.memory_space<vmem>>, vector<32x16xf32>
    %c0_1 = arith.constant 0 : index
    %c0_2 = arith.constant 0 : index
    %1 = vector.load %arg2[%c0_1, %c0_2] : memref<16x8xf32, #tpu.memory_space<vmem>>, vector<16x8xf32>
    %cst = arith.constant dense<0.000000e+00> : vector<32x8xf32>
    %2 = tpu.matmul %0, %1, %cst {dimension_numbers = #tpu.dot_dimension_numbers<[1], [0], [0], [1], [0, 0, 1, 1], [], []>} : vector<32x16xf32>, vector<16x8xf32>, vector<32x8xf32> -> vector<32x8xf32>
    %c0_3 = arith.constant 0 : index
    %c0_4 = arith.constant 0 : index
    %3 = vector.load %arg3[%c0_3, %c0_4] : memref<32x8xf32, #tpu.memory_space<vmem>>, vector<32x8xf32>
    tpu.vector_store %arg3[%c0_3, %c0_4], %2 {strides = array<i32>} : memref<32x8xf32, #tpu.memory_space<vmem>>, vector<32x8xf32>,
    return
  }
  func.func @transform_0(%arg0: i32) -> (i32, i32) {
    %c0_i32 = arith.constant 0 : i32
    %c0_i32_0 = arith.constant 0 : i32
    return %arg0, %c0_i32 : i32, i32
  }
  func.func @transform_1(%arg0: i32) -> (i32, i32) {
    %c0_i32 = arith.constant 0 : i32
    %c0_i32_0 = arith.constant 0 : i32
    %c0_i32_1 = arith.constant 0 : i32
    return %c0_i32, %c0_i32_0 : i32, i32
  }
  func.func @transform_2(%arg0: i32) -> (i32, i32) {
    %c0_i32 = arith.constant 0 : i32
    %c0_i32_0 = arith.constant 0 : i32
    return %arg0, %c0_i32 : i32, i32
  }
}

</mosaic_0001>

<llo_original>
// kernel: tpu_custom_call.1
$region0: #{tpu_custom_call.1}
  #allocation0 [shape = 'u32[]', space=smem, size = 0x4, offset = 0x4, fixed_abs, tag = 'smem constant byte address 0x4 - core index']
  #allocation1 [shape = 'u32[144,128]{1,0:T(1,128)}', space=vmem, size = 0x12000, scoped, tag = 'internal scratch']
  %s0 = inlined_call_operand.vmem [shape: f32[64,32], index: 0, kind: input, shape index: {}]
  %s1 = inlined_call_operand.vmem [shape: f32[16,8], index: 1, kind: input, shape index: {}]
  %s2 = inlined_call_operand.vmem [shape: f32[64,8], index: 2, kind: output, shape index: {}]
  %s3 = sld [smem:[#allocation0]]
  $region41: #{tpu_custom_call.1} parent=0
    _
  %s5 = ssub.s32 1, %s3
  %s6 = scalar_select 0, %s5, %s3
  loop: start=0, step=1, limit=4
  $region2: #{tpu_custom_call.1} parent=0 // loop_pre_header
    _
  $region3: #{tpu_custom_call.1} parent=0 // loop_header
    %s8 = sphi 0, %s12
    %p9 = scmp.ge.s32.totalorder %s8, 4
    %s18 = sphi 0, %s20
    %s21 = sphi 0, %s18
    %s22 = sphi 0, %s21
    %s38 = sphi 0, %s22
    %s42 = sphi 0, %s42
    %s44 = sphi 0, %s42
    %s45 = sphi 0, %s44
    %s59 = sphi 0, %s45
    %s65 = sphi 0, %s67
    %s68 = sphi 0, %s65
    %s69 = sphi 0, %s68
    %s85 = sphi 0, %s69
  $region4: #{tpu_custom_call.1} parent=0 // loop_header_branch
    %11 = sbr.rel (%p9) target = $region8
  $region5: #{tpu_custom_call.1} parent=0 // loop_body
    %s13 = ssub.s32 %s8, 1
    %s14 = ssub.s32 %s8, 2
    %s15 = sadd.s32 %s8, 1
    %s16 = ssub.s32 %s8, %s15
    %p17 = scmp.eq.s32.totalorder %s16, 0
    %s19 = sadd.s32 %s18, 1
    %s20 = scalar_select %p17, %s18, %s19
    %p23 = pneg %p17
    %p24 = scmp.eq.s32.totalorder %s8, 1
    %p25 = por %p23, %p24
    %p26 = scmp.ne.s32.totalorder %s18, %s21
    %p27 = scmp.eq.s32.totalorder %s8, 0
    %p28 = por %p26, %p27
    %p29 = scmp.ne.s32.totalorder %s18, %s21
    %p30 = scmp.eq.s32.totalorder %s13, 1
    %p31 = por %p29, %p30
    %p32 = scmp.ne.s32.totalorder %s21, %s22
    %p33 = scmp.eq.s32.totalorder %s13, 0
    %p34 = por %p32, %p33
    %p35 = scmp.ne.s32.totalorder %s21, %s22
    %p36 = scmp.eq.s32.totalorder %s14, 1
    %p37 = por %p35, %p36
    %p39 = scmp.ne.s32.totalorder %s22, %s38
    %p40 = scmp.eq.s32.totalorder %s14, 0
    %p41 = por %p39, %p40
    %s43 = sadd.s32 %s42, 1
    %p46 = scmp.eq.s32.totalorder %s8, 1
    %p47 = scmp.ne.s32.totalorder %s42, %s44
    %p48 = scmp.eq.s32.totalorder %s8, 0
    %p49 = por %p47, %p48
    %p50 = scmp.ne.s32.totalorder %s42, %s44
    %p51 = scmp.eq.s32.totalorder %s13, 1
    %p52 = por %p50, %p51
    %p53 = scmp.ne.s32.totalorder %s44, %s45
    %p54 = scmp.eq.s32.totalorder %s13, 0
    %p55 = por %p53, %p54
    %p56 = scmp.ne.s32.totalorder %s44, %s45
    %p57 = scmp.eq.s32.totalorder %s14, 1
    %p58 = por %p56, %p57
    %p60 = scmp.ne.s32.totalorder %s45, %s59
    %p61 = scmp.eq.s32.totalorder %s14, 0
    %p62 = por %p60, %p61
    %s63 = ssub.s32 %s8, %s15
    %p64 = scmp.eq.s32.totalorder %s63, 0
    %s66 = sadd.s32 %s65, 1
    %s67 = scalar_select %p64, %s65, %s66
    %p70 = pneg %p64
    %p71 = scmp.eq.s32.totalorder %s8, 1
    %p72 = por %p70, %p71
    %p73 = scmp.ne.s32.totalorder %s65, %s68
    %p74 = scmp.eq.s32.totalorder %s8, 0
    %p75 = por %p73, %p74
    %p76 = scmp.ne.s32.totalorder %s65, %s68
    %p77 = scmp.eq.s32.totalorder %s13, 1
    %p78 = por %p76, %p77
    %p79 = scmp.ne.s32.totalorder %s68, %s69
    %p80 = scmp.eq.s32.totalorder %s13, 0
    %p81 = por %p79, %p80
    %p82 = scmp.ne.s32.totalorder %s68, %s69
    %p83 = scmp.eq.s32.totalorder %s14, 1
    %p84 = por %p82, %p83
    %p86 = scmp.ne.s32.totalorder %s69, %s85
    %p87 = scmp.eq.s32.totalorder %s14, 0
    %p88 = por %p86, %p87
    %p89 = scmp.le.s32.totalorder 1, %s8
    %p90 = scmp.lt.s32.totalorder %s8, 3
    %p91 = pnand %p89, %p90
    %p92 = pneg %p91
    // Predicated region
    $region9: #{tpu_custom_call.1} parent=5 // pred_check
      _
    $region10: #{tpu_custom_call.1} parent=5 // pred_check_branch
      %94 = sbr.rel (%p91) target = $region12
    $region11: #{tpu_custom_call.1} parent=5 // pred_region
      %s95 = ssub.s32 %s8, 1
      // Predicated region
      $region13: #{tpu_custom_call.1} parent=11 // pred_check
        %p96 = pneg %p55
      $region14: #{tpu_custom_call.1} parent=11 // pred_check_branch
        %98 = sbr.rel (%p96) target = $region16
      $region15: #{tpu_custom_call.1} parent=11 // pred_region
        _
      $region16: #{tpu_custom_call.1} parent=11 // pred_fallthru
        _
    $region12: #{tpu_custom_call.1} parent=5 // pred_fallthru
      _
    %p99 = scmp.lt.s32.totalorder %s8, 2
    // Predicated region
    $region17: #{tpu_custom_call.1} parent=5 // pred_check
      %p100 = pneg %p99
    $region18: #{tpu_custom_call.1} parent=5 // pred_check_branch
      %102 = sbr.rel (%p100) target = $region20
    $region19: #{tpu_custom_call.1} parent=5 // pred_region
      // Predicated region
      $region21: #{tpu_custom_call.1} parent=19 // pred_check
        %p103 = pneg %p28
      $region22: #{tpu_custom_call.1} parent=19 // pred_check_branch
        %105 = sbr.rel (%p103) target = $region24
      $region23: #{tpu_custom_call.1} parent=19 // pred_region
        %s106 = smul.u32 4, %s8
        %p107 = scmp.lt.s32.totalorder %s106, 7
        %s108 = scalar_select %p107, %s106, 7
        %s109 = smul.addr %s108, 8
        %s110 = scalar_lea.vmem %s0, %s109
        %s111 = smul.u32 4, %s8
      $region24: #{tpu_custom_call.1} parent=19 // pred_fallthru
        _
    $region20: #{tpu_custom_call.1} parent=5 // pred_fallthru
      _
    %p112 = scmp.le.s32.totalorder 1, %s8
    %p113 = scmp.lt.s32.totalorder %s8, 3
    %p114 = pnand %p112, %p113
    %p115 = pneg %p114
    // Predicated region
    $region25: #{tpu_custom_call.1} parent=5 // pred_check
      _
    $region26: #{tpu_custom_call.1} parent=5 // pred_check_branch
      %117 = sbr.rel (%p114) target = $region28
    $region27: #{tpu_custom_call.1} parent=5 // pred_region
      %s118 = ssub.s32 %s8, 1
      %s119 = smul.u32 4, %s13
      %p120 = scmp.lt.s32.totalorder %s119, 7
      %s121 = scalar_select %p120, %s119, 7
      %s122 = smul.addr %s121, 8
      %s123 = scalar_lea.vmem %s0, %s122
      %p124 = pneg %p34
      %p125 = pneg %p31
      %p126 = pneg %p55
      %p127 = pneg %p52
      %p128 = pneg %p81
      %p129 = pneg %p78
      %s130 = smul.u32 4, %s13
      %p131 = scmp.lt.s32.totalorder %s130, 7
      %s132 = scalar_select %p131, %s130, 7
      %s133 = smul.addr %s132, 8
      %s134 = scalar_lea.vmem %s2, %s133
      %s135 = smul.u32 4, %s13
      %p136 = scmp.lt.s32.totalorder %s135, 7
      %s137 = scalar_select %p136, %s135, 7
      %s138 = smul.addr %s137, 8
      %s139 = scalar_lea.vmem %s0, %s138
      %s140 = smul.u32 4, %s13
      %s141 = smul.u32 4, %s13
      %p142 = scmp.lt.s32.totalorder %s141, 7
      %s143 = scalar_select %p142, %s141, 7
      %s144 = smul.addr %s143, 8
      %s145 = scalar_lea.vmem %s2, %s144
      %s146 = smul.u32 4, %s13
      %v147 = vld [vmem:[%s139] sm:$0xff]
      %v148 = vld [vmem:[%s139 + $0x8] sm:$0xff]
      %v149 = vld [vmem:[%s139 + $0x10] sm:$0xff]
      %v150 = vld [vmem:[%s139 + $0x18] sm:$0xff]
      %v151 = vld [vmem:[%s1] sm:$0xff]
      %v152 = vld [vmem:[%s1 + $0x8] sm:$0xff]
      %vm153 = vcmask 130048
      %v155 = vsel %vm153, %v147, 0
      %v158 = vsel %vm153, %v148, 0
      %v161 = vsel %vm153, %v149, 0
      %v164 = vsel %vm153, %v150, 0
      %166 = vmatprep.subr.mxu0 0.0
      %167 = vmatpush1.msra.mxu0 0.0
      %168 = vmatprep.subr.mxu0 0.0
      %169 = vmatpush1.msra.mxu0 0.0
      %170 = vmatprep.subr.mxu0 0.0
      %171 = vmatpush1.msra.mxu0 0.0
      %172 = vmatprep.subr.mxu0 0.0
      %173 = vmatpush1.msra.mxu0 0.0
      %174 = vmatprep.subr.mxu0 0.0
      %175 = vmatpush1.msra.mxu0 0.0
      %176 = vmatprep.subr.mxu0 0.0
      %177 = vmatpush1.msra.mxu0 0.0
      %178 = vmatprep.subr.mxu0 0.0
      %179 = vmatpush1.msra.mxu0 0.0
      %180 = vmatprep.subr.mxu0 0.0
      %181 = vmatpush1.msra.mxu0 0.0
      %182 = vmatprep.subr.mxu0 0.0
      %183 = vmatpush1.msra.mxu0 0.0
      %184 = vmatprep.subr.mxu0 0.0
      %185 = vmatpush1.msra.mxu0 0.0
      %186 = vmatprep.subr.mxu0 0.0
      %187 = vmatpush1.msra.mxu0 0.0
      %188 = vmatprep.subr.mxu0 0.0
      %189 = vmatpush1.msra.mxu0 0.0
      %190 = vmatprep.subr.mxu0 0.0
      %191 = vmatpush1.msra.mxu0 0.0
      %192 = vmatprep.subr.mxu0 0.0
      %193 = vmatpush1.msra.mxu0 0.0
      %194 = vmatprep.subr.mxu0 0.0
      %195 = vmatpush1.msra.mxu0 %v152
      %196 = vmatprep.subr.mxu0 0.0
      %197 = vmatpush1.msra.mxu0 %v151
      %198 = vmatprep.subr.mxu0 0.0
      %199 = vmatpush2.msra.mxu0 0.0
      %200 = vmatprep.subr.mxu0 0.0
      %201 = vmatpush2.msra.mxu0 0.0
      %202 = vmatprep.subr.mxu0 0.0
      %203 = vmatpush2.msra.mxu0 0.0
      %204 = vmatprep.subr.mxu0 0.0
      %205 = vmatpush2.msra.mxu0 0.0
      %206 = vmatprep.subr.mxu0 0.0
      %207 = vmatpush2.msra.mxu0 0.0
      %208 = vmatprep.subr.mxu0 0.0
      %209 = vmatpush2.msra.mxu0 0.0
      %210 = vmatprep.subr.mxu0 0.0
      %211 = vmatpush2.msra.mxu0 0.0
      %212 = vmatprep.subr.mxu0 0.0
      %213 = vmatpush2.msra.mxu0 0.0
      %214 = vmatprep.subr.mxu0 0.0
      %215 = vmatpush2.msra.mxu0 0.0
      %216 = vmatprep.subr.mxu0 0.0
      %217 = vmatpush2.msra.mxu0 0.0
      %218 = vmatprep.subr.mxu0 0.0
      %219 = vmatpush2.msra.mxu0 0.0
      %220 = vmatprep.subr.mxu0 0.0
      %221 = vmatpush2.msra.mxu0 0.0
      %222 = vmatprep.subr.mxu0 0.0
      %223 = vmatpush2.msra.mxu0 0.0
      %224 = vmatprep.subr.mxu0 0.0
      %225 = vmatpush2.msra.mxu0 0.0
      %226 = vmatprep.subr.mxu0 0.0
      %227 = vmatpush2.msra.mxu0 0.0
      %228 = vmatprep.subr.mxu0 0.0
      %229 = vmatpush2.msra.mxu0 0.0
      %230 = vmatprep.mubr.f32.mxu0 0.0
      %231 = vmatmul.mubr.f32.gmra.mxu0 %v155
      %v232 = vpop.f32.mrf.mxu0
      %v233 = vadd.f32 0.0, %v232
      %v234 = vpop.f32.mrf.mxu0
      %235 = vmatprep.mubr.f32.mxu0 0.0
      %236 = vmatmul.mubr.f32.gmra.mxu0 %v158
      %v237 = vpop.f32.mrf.mxu0
      %v238 = vadd.f32 0.0, %v237
      %v239 = vpop.f32.mrf.mxu0
      %240 = vmatprep.mubr.f32.mxu0 0.0
      %241 = vmatmul.mubr.f32.gmra.mxu0 %v161
      %v242 = vpop.f32.mrf.mxu0
      %v243 = vadd.f32 0.0, %v242
      %v244 = vpop.f32.mrf.mxu0
      %245 = vmatprep.mubr.f32.mxu0 0.0
      %246 = vmatmul.mubr.f32.gmra.mxu0 %v164
      %v247 = vpop.f32.mrf.mxu0
      %v248 = vadd.f32 0.0, %v247
      %v249 = vpop.f32.mrf.mxu0
      %250 = vdwg.mxu0
      %vm251 = vcmask 64512
      %252 = vst.msk [vmem:[%s145] sm:$0xff] %vm251, %v233
      %253 = vst.msk [vmem:[%s145 + $0x8] sm:$0xff] %vm251, %v238
      %254 = vst.msk [vmem:[%s145 + $0x10] sm:$0xff] %vm251, %v243
      %255 = vst.msk [vmem:[%s145 + $0x18] sm:$0xff] %vm251, %v248
      %s256 = smul.u32 4, %s13
      %p257 = scmp.lt.s32.totalorder %s256, 7
      %s258 = scalar_select %p257, %s256, 7
      %s259 = smul.addr %s258, 8
      %s260 = scalar_lea.vmem %s2, %s259
      // Predicated region
      $region29: #{tpu_custom_call.1} parent=27 // pred_check
        %p261 = pneg %p78
      $region30: #{tpu_custom_call.1} parent=27 // pred_check_branch
        %263 = sbr.rel (%p261) target = $region32
      $region31: #{tpu_custom_call.1} parent=27 // pred_region
        %s264 = smul.u32 4, %s13
      $region32: #{tpu_custom_call.1} parent=27 // pred_fallthru
        _
    $region28: #{tpu_custom_call.1} parent=5 // pred_fallthru
      _
    %p265 = scmp.le.s32.totalorder 2, %s8
    // Predicated region
    $region33: #{tpu_custom_call.1} parent=5 // pred_check
      %p266 = pneg %p265
    $region34: #{tpu_custom_call.1} parent=5 // pred_check_branch
      %268 = sbr.rel (%p266) target = $region36
    $region35: #{tpu_custom_call.1} parent=5 // pred_region
      %s269 = ssub.s32 %s8, 2
      // Predicated region
      $region37: #{tpu_custom_call.1} parent=35 // pred_check
        %p270 = pneg %p84
      $region38: #{tpu_custom_call.1} parent=35 // pred_check_branch
        %272 = sbr.rel (%p270) target = $region40
      $region39: #{tpu_custom_call.1} parent=35 // pred_region
        %s273 = smul.u32 4, %s14
        %p274 = scmp.lt.s32.totalorder %s273, 7
        %s275 = scalar_select %p274, %s273, 7
        %s276 = smul.addr %s275, 8
        %s277 = scalar_lea.vmem %s2, %s276
      $region40: #{tpu_custom_call.1} parent=35 // pred_fallthru
        _
    $region36: #{tpu_custom_call.1} parent=5 // pred_fallthru
      _
  $region6: #{tpu_custom_call.1} parent=0 // loop_footer
    %s12 = sadd.s32 1, %s8
  $region7: #{tpu_custom_call.1} parent=0 // loop_footer_branch
    %7 = sbr.rel target = $region3
  $region8: #{tpu_custom_call.1} parent=0 // loop_exit
    _

</llo_original>
